<compile_context>
chip_gen: v6e
topology: v6e:2x2x1
jax: 0.10.0
libtpu: 0.0.40
codegen_flags: <defaults>
</compile_context>

<pallas_src>
import functools

import jax
import jax.numpy as jnp
from jax import lax
from jax.experimental import pallas as pl
from jax.experimental.pallas import tpu as pltpu


def _contrastive_loss_kernel(fp_ref, cov_ref, partial_ref, *, feat_dim, tile_b, true_b):
    # fp_ref:      (TB, 2*D) packed [x1 | x2] rows, native dtype
    # cov_ref:     (TB, 1)   f32 gathered coverage values
    # partial_ref: (1, 8, 128) f32 per-block partial sum (broadcast splat)
    blk = fp_ref[...].astype(jnp.float32)                      # single streamed read
    x1 = blk[:, :feat_dim]
    x2 = blk[:, feat_dim:]

    # Three fused reductions over the same tile.
    dot = jnp.sum(x1 * x2, axis=1, keepdims=True)              # (TB, 1)
    n1sq = jnp.sum(x1 * x1, axis=1, keepdims=True)             # (TB, 1)
    n2sq = jnp.sum(x2 * x2, axis=1, keepdims=True)             # (TB, 1)

    # torch CosineSimilarity(dim=1, eps=1e-6): cos = x1.x2 / max(||x1||*||x2||, eps)
    denom = jnp.maximum(jnp.sqrt(n1sq * n2sq), jnp.float32(1e-6))
    cos = dot / denom

    diff = jnp.abs(cos - cov_ref[...].astype(jnp.float32))     # (TB, 1)

    # Mask rows past the true batch size (zero-padded rows / OOB tail block).
    row = lax.broadcasted_iota(jnp.int32, (tile_b, 1), 0) + pl.program_id(0) * tile_b
    diff = jnp.where(row < true_b, diff, jnp.float32(0.0))

    partial_ref[...] = jnp.broadcast_to(
        jnp.sum(diff), partial_ref.shape
    ).astype(jnp.float32)


def contrastive_loss(features_pairs, lcas, cov_vec, *, max_tile_b=512):
    """features_pairs: [B, 2, D]; lcas: [B] int; cov_vec: [N] float -> scalar f32."""
    B, two, D = features_pairs.shape
    assert two == 2

    # Glue: the coverage-vector gather (index lookup) stays in plain JAX.
    lca_cov = cov_vec.reshape(-1)[lcas].astype(jnp.float32).reshape(B, 1)

    # Packed, lane-major view of the pairs: contiguous reshape, no HBM copy.
    fp = features_pairs.reshape(B, 2 * D)

    # Pad batch to a multiple of 8 (sublane granularity). Zero rows are masked.
    b_pad = max(8, ((B + 7) // 8) * 8)
    if b_pad != B:
        fp = jnp.pad(fp, ((0, b_pad - B), (0, 0)))
        lca_cov = jnp.pad(lca_cov, ((0, b_pad - B), (0, 0)))

    # Batch tile: large enough to pipeline well, small enough that the
    # double-buffered f32 working set fits VMEM on every generation.
    bytes_per_row_f32 = 2 * D * 4                       # f32 working copy dominates
    vmem_budget = 20 << 20                              # conservative, all generations
    tb_cap = max(8, (vmem_budget // (4 * bytes_per_row_f32)) // 8 * 8)
    tile_b = int(min(max_tile_b, tb_cap, b_pad))
    tile_b = max(8, (tile_b // 8) * 8)
    num_blocks = (b_pad + tile_b - 1) // tile_b

    in_itemsize = jnp.dtype(features_pairs.dtype).itemsize
    vmem_limit = int(
        min(
            # double-buffered native-dtype inputs + f32 intermediates + headroom
            max(4 * tile_b * 2 * D * in_itemsize + 6 * tile_b * 2 * D * 4 + (2 << 20),
                4 << 20),
            64 << 20,
        )
    )

    kernel = functools.partial(
        _contrastive_loss_kernel, feat_dim=D, tile_b=tile_b, true_b=B
    )

    partials = pl.pallas_call(
        kernel,
        out_shape=jax.ShapeDtypeStruct((num_blocks, 8, 128), jnp.float32),
        grid_spec=pltpu.PrefetchScalarGridSpec(
            num_scalar_prefetch=0,
            grid=(num_blocks,),
            in_specs=[
                pl.BlockSpec((tile_b, 2 * D), lambda i: (i, 0)),
                pl.BlockSpec((tile_b, 1), lambda i: (i, 0)),
            ],
            out_specs=pl.BlockSpec((1, 8, 128), lambda i: (i, 0, 0)),
        ),
        compiler_params=pltpu.CompilerParams(
            dimension_semantics=("parallel",),
            vmem_limit_bytes=vmem_limit,
        ),
    )(fp, lca_cov)

    # Finish the tiny reduction in JAX: sum of per-block partials / true B.
    return jnp.sum(partials[:, 0, 0]) / jnp.float32(B)


def _reference_loss(features_pairs, lcas, cov_vec):
    x1 = features_pairs[:, 0, :].astype(jnp.float32)
    x2 = features_pairs[:, 1, :].astype(jnp.float32)
    dot = jnp.sum(x1 * x2, axis=1)
    denom = jnp.maximum(
        jnp.linalg.norm(x1, axis=1) * jnp.linalg.norm(x2, axis=1), 1e-6
    )
    cos = dot / denom
    lca_cov = cov_vec.reshape(-1)[lcas].astype(jnp.float32)
    return jnp.mean(jnp.abs(cos - lca_cov))


if __name__ == "__main__":
    key = jax.random.PRNGKey(0)

    # --- small demo shape (matches the module's forward) ---
    k1, k2, k3 = jax.random.split(key, 3)
    B, D = 8, 32
    NUM_NODES = 16
    features_pairs = jax.random.normal(k1, (B, 2, D), dtype=jnp.float32)
    lcas = jax.random.randint(k2, (B,), 0, NUM_NODES, dtype=jnp.int32)
    cov_vec = jax.random.uniform(k3, (NUM_NODES,), dtype=jnp.float32)

    loss = jax.block_until_ready(contrastive_loss(features_pairs, lcas, cov_vec))
    ref = _reference_loss(features_pairs, lcas, cov_vec)
    assert jnp.allclose(loss, ref, atol=1e-5, rtol=1e-5), (loss, ref)

    # --- multi-block / tail-masking check (B not a multiple of the tile) ---
    k4, k5, k6 = jax.random.split(jax.random.PRNGKey(1), 3)
    B2, D2 = 1100, 128
    fp2 = jax.random.normal(k4, (B2, 2, D2), dtype=jnp.float32)
    lcas2 = jax.random.randint(k5, (B2,), 0, NUM_NODES, dtype=jnp.int32)
    loss2 = jax.block_until_ready(contrastive_loss(fp2, lcas2, cov_vec))
    ref2 = _reference_loss(fp2, lcas2, cov_vec)
    assert jnp.allclose(loss2, ref2, atol=1e-5, rtol=1e-5), (loss2, ref2)

    print("KERNEL_OK")
</pallas_src>

<mosaic_0001>
module attributes {stable_mosaic.version = 11 : i64} {
  func.func @_contrastive_loss_kernel(%arg0: i32, %arg1: memref<8x64xf32, #tpu.memory_space<vmem>>, %arg2: memref<8x1xf32, #tpu.memory_space<vmem>>, %arg3: memref<1x8x128xf32, #tpu.memory_space<vmem>>) attributes {dimension_semantics = [#tpu.dimension_semantics<parallel>], iteration_bounds = array<i64: 1>, scalar_prefetch = 0 : i64, scratch_operands = 0 : i64, tpu.core_type = #tpu.core_type<tc>, window_params = [{transform_indices = @transform_0, window_bounds = array<i64: 8, 64>}, {transform_indices = @transform_1, window_bounds = array<i64: 8, 1>}, {transform_indices = @transform_2, window_bounds = array<i64: 1, 8, 128>}]} {
    %c0 = arith.constant 0 : index
    %c0_0 = arith.constant 0 : index
    %0 = vector.load %arg1[%c0, %c0_0] : memref<8x64xf32, #tpu.memory_space<vmem>>, vector<8x64xf32>
    %1 = vector.extract_strided_slice %0 {offsets = [0, 0], sizes = [8, 32], strides = [1, 1]} : vector<8x64xf32> to vector<8x32xf32>
    %2 = vector.extract_strided_slice %0 {offsets = [0, 32], sizes = [8, 32], strides = [1, 1]} : vector<8x64xf32> to vector<8x32xf32>
    %3 = arith.mulf %1, %2 : vector<8x32xf32>
    %cst = arith.constant dense<0.000000e+00> : vector<8xf32>
    %4 = vector.multi_reduction <add>, %3, %cst [1] : vector<8x32xf32> to vector<8xf32>
    %5 = vector.shape_cast %4 : vector<8xf32> to vector<8x1xf32>
    %6 = arith.mulf %1, %1 : vector<8x32xf32>
    %cst_1 = arith.constant dense<0.000000e+00> : vector<8xf32>
    %7 = vector.multi_reduction <add>, %6, %cst_1 [1] : vector<8x32xf32> to vector<8xf32>
    %8 = vector.shape_cast %7 : vector<8xf32> to vector<8x1xf32>
    %9 = arith.mulf %2, %2 : vector<8x32xf32>
    %cst_2 = arith.constant dense<0.000000e+00> : vector<8xf32>
    %10 = vector.multi_reduction <add>, %9, %cst_2 [1] : vector<8x32xf32> to vector<8xf32>
    %11 = vector.shape_cast %10 : vector<8xf32> to vector<8x1xf32>
    %12 = arith.mulf %8, %11 : vector<8x1xf32>
    %13 = math.sqrt %12 : vector<8x1xf32>
    %cst_3 = arith.constant 9.99999997E-7 : f32
    %14 = vector.broadcast %cst_3 : f32 to vector<8x1xf32>
    %15 = arith.maximumf %13, %14 : vector<8x1xf32>
    %16 = arith.divf %5, %15 : vector<8x1xf32>
    %c0_4 = arith.constant 0 : index
    %c0_5 = arith.constant 0 : index
    %17 = vector.load %arg2[%c0_4, %c0_5] : memref<8x1xf32, #tpu.memory_space<vmem>>, vector<8x1xf32>
    %18 = arith.subf %16, %17 : vector<8x1xf32>
    %19 = math.absf %18 : vector<8x1xf32>
    %20 = tpu.iota {dimensions = array<i32: 0>} : vector<8x1xi32>
    %c8_i32 = arith.constant 8 : i32
    %21 = arith.muli %arg0, %c8_i32 : i32
    %22 = vector.broadcast %21 : i32 to vector<8x1xi32>
    %23 = arith.addi %20, %22 : vector<8x1xi32>
    %c8_i32_6 = arith.constant 8 : i32
    %24 = vector.broadcast %c8_i32_6 : i32 to vector<8x1xi32>
    %25 = arith.cmpi slt, %23, %24 : vector<8x1xi32>
    %cst_7 = arith.constant 0.000000e+00 : f32
    %26 = vector.broadcast %cst_7 : f32 to vector<8x1xf32>
    %27 = arith.select %25, %19, %26 : vector<8x1xi1>, vector<8x1xf32>
    %28 = vector.shape_cast %27 : vector<8x1xf32> to vector<1x8x1xf32>
    %cst_8 = arith.constant dense<0.000000e+00> : vector<1xf32>
    %29 = vector.multi_reduction <add>, %28, %cst_8 [1, 2] : vector<1x8x1xf32> to vector<1xf32>
    %30 = vector.shape_cast %29 : vector<1xf32> to vector<1x1x1xf32>
    %31 = vector.extract %30[0, 0, 0] : f32 from vector<1x1x1xf32>
    %32 = vector.broadcast %31 : f32 to vector<1x8x128xf32>
    %c0_9 = arith.constant 0 : index
    %c0_10 = arith.constant 0 : index
    %c0_11 = arith.constant 0 : index
    %33 = vector.load %arg3[%c0_9, %c0_10, %c0_11] : memref<1x8x128xf32, #tpu.memory_space<vmem>>, vector<1x8x128xf32>
    tpu.vector_store %arg3[%c0_9, %c0_10, %c0_11], %32 {strides = array<i32>} : memref<1x8x128xf32, #tpu.memory_space<vmem>>, vector<1x8x128xf32>,
    return
  }
  func.func @transform_0(%arg0: i32) -> (i32, i32) {
    %c0_i32 = arith.constant 0 : i32
    %c0_i32_0 = arith.constant 0 : i32
    return %arg0, %c0_i32 : i32, i32
  }
  func.func @transform_1(%arg0: i32) -> (i32, i32) {
    %c0_i32 = arith.constant 0 : i32
    %c0_i32_0 = arith.constant 0 : i32
    return %arg0, %c0_i32 : i32, i32
  }
  func.func @transform_2(%arg0: i32) -> (i32, i32, i32) {
    %c0_i32 = arith.constant 0 : i32
    %c0_i32_0 = arith.constant 0 : i32
    %c0_i32_1 = arith.constant 0 : i32
    return %arg0, %c0_i32, %c0_i32_0 : i32, i32, i32
  }
}

</mosaic_0001>

<llo_original>
// kernel: tpu_custom_call.1
$region0: #{tpu_custom_call.1}
  #allocation0 [shape = 'u32[]', space=smem, size = 0x4, offset = 0x4, fixed_abs, tag = 'smem constant byte address 0x4 - core index']
  #allocation1 [shape = 'u32[144,128]{1,0:T(1,128)}', space=vmem, size = 0x12000, scoped, tag = 'internal scratch']
  %s0 = inlined_call_operand.vmem [shape: f32[8,64], index: 0, kind: input, shape index: {}]
  %s1 = inlined_call_operand.vmem [shape: f32[8,1], index: 1, kind: input, shape index: {}]
  %s2 = inlined_call_operand.hbm [shape: f32[1,8,128], index: 2, kind: output, shape index: {}]
  %s3 = sld [smem:[#allocation0]]
  $region18: #{tpu_custom_call.1} parent=0
    _
  %s5 = ssub.s32 1, %s3
  %s6 = scalar_select 0, %s5, %s3
  $region1: #{tpu_custom_call.1} parent=0
    #allocation2 [shape = 'u8[4096]{0}', space=vmem, size = 0x1000, scoped, tag = 'output window, operand 0, single buffered']
    #allocation3 [shape = 's32[1]{0}', space=sflag, size = 0x4, scoped, tag = 'scoped memory for tpu_custom_call.1']
    %7 = vsyncpa [#allocation3], 0
    // Predicated region
    $region2: #{tpu_custom_call.1} parent=1 // pred_check
      _
    $region3: #{tpu_custom_call.1} parent=1 // pred_check_branch
      %9 = sbr.rel (0) target = $region5
    $region4: #{tpu_custom_call.1} parent=1 // pred_region
      _
    $region5: #{tpu_custom_call.1} parent=1 // pred_fallthru
      _
    // Predicated region
    $region6: #{tpu_custom_call.1} parent=1 // pred_check
      _
    $region7: #{tpu_custom_call.1} parent=1 // pred_check_branch
      %11 = sbr.rel (0) target = $region9
    $region8: #{tpu_custom_call.1} parent=1 // pred_region
      _
    $region9: #{tpu_custom_call.1} parent=1 // pred_fallthru
      _
    %v12 = vld [vmem:[%s0] sm:$0xff]
    %14 = vrot.lane.b32.xlu0 %v12, 96
    %v15 = vpop.permute.xlu0 %14
    %v17 = vmul.f32 %v12, %v15
    %vm18 = vcmask 261120
    %v19 = vsel %vm18, %v17, 0.0
    %20 = vadd.xlane.f32.xlu0 %v19
    %v21 = vpop.xlane.xlu0 %20
    %v22 = vmul.f32 %v12, %v12
    %v23 = vsel %vm18, %v22, 0.0
    %24 = vadd.xlane.f32.xlu0 %v23
    %v25 = vpop.xlane.xlu0 %24
    %27 = vrot.lane.b32.xlu0 %v22, 96
    %v28 = vpop.permute.xlu0 %27
    %v30 = vsel %vm18, %v28, 0.0
    %31 = vadd.xlane.f32.xlu0 %v30
    %v32 = vpop.xlane.xlu0 %31
    %v33 = vmul.f32 %v25, %v32
    %v34 = vrsqrt.pop %v33
    %v35 = vmul.f32 %v33, %v34
    %vm36 = vcmp.eq.f32.partialorder %v33, inf
    %v37 = vsel %vm36, %v33, %v35
    %vm38 = vcmp.eq.f32.partialorder %v33, 0.0
    %v39 = vand.u32 %v33, 2147483648
    %v40 = vsel %vm38, %v39, %v37
    %v41 = vmax.f32 %v40, 1e-06
    %v42 = vrcp.pop %v41
    %v43 = vmul.f32 %v21, %v42
    %v44 = vld [vmem:[%s1] sm:$0xff]
    %v45 = vsub.f32 %v43, %v44
    %v46 = vand.u32 2147483647, %v45
    %v47 = vlaneseq
    %v48 = vshrl.u32 %v47, 7
    %s49 = smul.u32 0, 8
    %v50 = vstv %s49
    %v51 = vadd.s32 %v48, %v50
    %vm52 = vcmp.lt.s32.totalorder %v51, 8
    %v53 = vsel %vm52, %v46, 0.0
    %vm54 = vcmask 7168
    %v55 = vsel %vm54, %v53, 0.0
    %56 = vadd.xlane.f32.xlu0 %v55
    %v57 = vpop.xlane.xlu0 %56
    %v58 = vrot.slane %v57, 4
    %v59 = vadd.f32 %v57, %v58
    %v60 = vrot.slane %v59, 2
    %v61 = vadd.f32 %v59, %v60
    %v62 = vrot.slane %v61, 1
    %v63 = vadd.f32 %v61, %v62
    %s64 = vtos %v63
    %v65 = vstv %s64
    %66 = vst [vmem:[#allocation2] sm:$0xff] %v65
    // Predicated region
    $region10: #{tpu_custom_call.1} parent=1 // pred_check
      _
    $region11: #{tpu_custom_call.1} parent=1 // pred_check_branch
      %68 = sbr.rel (0) target = $region13
    $region12: #{tpu_custom_call.1} parent=1 // pred_region
      %s70 = ssub.s32 128, 128
      %71 = vsyncadd [#allocation3], %s70
      %s73 = sshll.u32 [#allocation2], 4
      %s74 = int_to_ptr.vmem [resolvable:$true] %s73
      %76 = dma.vmem_to_hbm [thread:$0]  %s74, 128, %s2, [#allocation3]
    $region13: #{tpu_custom_call.1} parent=1 // pred_fallthru
      _
    // Predicated region
    $region14: #{tpu_custom_call.1} parent=1 // pred_check
      _
    $region15: #{tpu_custom_call.1} parent=1 // pred_check_branch
      %78 = sbr.rel (0) target = $region17
    $region16: #{tpu_custom_call.1} parent=1 // pred_region
      %79 = dma.done [#allocation3], 128
    $region17: #{tpu_custom_call.1} parent=1 // pred_fallthru
      _
    %80 = vsyncpa [#allocation3], 1

</llo_original>
